<compile_context>
chip_gen: v5e
topology: v5e:2x2
jax: 0.10.0
libtpu: 0.0.40
codegen_flags: <defaults>
</compile_context>

<pallas_src>
import math

import jax
import jax.numpy as jnp
import numpy as np
from jax.experimental import pallas as pl
from jax.experimental.pallas import tpu as pltpu

# ---- problem sizes (small, consistent with the module's forward) ----
N = 2            # batch
L = 16           # sequence length of x (context tokens)
CONTEXT_DIM = 32 # kdim / vdim
D_MODEL = 32     # embed dim
N_HEAD = 4
N_QUERIES = 8
HEAD_DIM = D_MODEL // N_HEAD
EPS = 1e-5


def _layernorm(x, w, b):
    mu = jnp.mean(x, axis=-1, keepdims=True)
    var = jnp.mean((x - mu) ** 2, axis=-1, keepdims=True)
    return (x - mu) * jax.lax.rsqrt(var + EPS) * w + b


def pooler_kernel(x_ref, query_ref, vecs_ref, wq_ref, wkv_ref, bkv_ref, out_ref):
    n, l, c = x_ref.shape                  # (N, L, CONTEXT_DIM)
    nq, d = query_ref.shape                # (N_QUERIES, D_MODEL)
    h = wkv_ref.shape[1] // d - 1          # wkv cols = h*d (V') + d (K)
    hd = d // h

    vecs = vecs_ref[...]                   # (6, C) packed vector params
    lnq_w, lnq_b = vecs[0:1, :], vecs[1:2, :]
    lnk_w, lnk_b = vecs[2:3, :], vecs[3:4, :]
    o_b = vecs[4:5, :]
    bq = vecs[5:6, :]                      # already scaled by 1/sqrt(hd)

    # --- LayerNorms (eps=1e-5, affine), all f32 ---
    x2d = x_ref[...].reshape(n * l, c)                      # free leading reshape
    xk = _layernorm(x2d, lnk_w, lnk_b)                      # (n*l, c)
    qn = _layernorm(query_ref[...], lnq_w, lnq_b)           # (nq, d) -- once

    # --- full-width, lane-dense projections -------------------------------
    # Q: 1/sqrt(head_dim) is folded into wq/bq on the host (exact).
    q = jnp.dot(qn, wq_ref[...],
                preferred_element_type=jnp.float32) + bq    # (nq, d)
    # Fused K + V' projection (V' has Wo folded in per head on the host):
    #   columns [0 : h*d)      -> V'  (head i in lanes [i*d:(i+1)*d))
    #   columns [h*d : h*d+d)  -> K   (head i in lanes [i*hd:(i+1)*hd))
    kv = jnp.dot(xk, wkv_ref[...],
                 preferred_element_type=jnp.float32) + bkv_ref[...]   # (n*l, h*d+d)
    vp = kv[:, : h * d]                                     # (n*l, h*d)  vreg-aligned
    k = kv[:, h * d:]                                       # (n*l, d)    vreg-aligned

    k3 = k.reshape(n, l, d)                                 # free leading reshapes
    v3 = vp.reshape(n, l, h * d)
    q_b = jnp.broadcast_to(q[None], (n, nq, d))             # one leading broadcast

    # --- attention: heads split only on the small results ------------------
    acc = None
    for i in range(h):                                      # static unroll, h=4
        q_i = q_b[:, :, i * hd:(i + 1) * hd]                # (n, nq, hd)
        k_i = k3[:, :, i * hd:(i + 1) * hd]                 # (n, l, hd)
        v_i = v3[:, :, i * d:(i + 1) * d]                   # (n, l, d)

        s = jnp.einsum("bqj,bkj->bqk", q_i, k_i,
                       preferred_element_type=jnp.float32)  # (n, nq, l)
        s = s - jnp.max(s, axis=-1, keepdims=True)
        p = jnp.exp(s)
        p = p * pl.reciprocal(jnp.sum(p, axis=-1, keepdims=True), approx=True)
        o_i = jnp.einsum("bqk,bkd->bqd", p, v_i,
                         preferred_element_type=jnp.float32)  # (n, nq, d)
        acc = o_i if acc is None else acc + o_i

    out_ref[...] = (acc + o_b).astype(out_ref.dtype)         # (n, nq, d)


def pack_params(params):
    """Precompute packed kernel operands ONCE (hoisted out of the call path)."""
    d = params["q_w"].shape[0]
    c = params["k_w"].shape[1]
    h = N_HEAD
    hd = d // h
    assert d % h == 0
    assert c == d, "packed (6, C) vector operand assumes context_dim == d_model"
    scale = 1.0 / math.sqrt(hd)

    # Q projection with 1/sqrt(head_dim) folded in (exact rescaling).
    wq = (params["q_w"] * scale).T                                 # (d, d)
    bq = params["q_b"] * scale                                     # (d,)

    # Fold the output projection into V (exact, matmul associativity):
    #   W_vo_h = Wv_h^T @ Wo_rows_h ,  b_vo_h = bv_h @ Wo_rows_h
    o_wT = params["o_w"].T.reshape(h, hd, d)                       # (h, hd, d)
    v_wT = params["v_w"].T.reshape(c, h, hd)                       # (c, h, hd)
    w_vo = jnp.einsum("chk,hkd->chd", v_wT, o_wT).reshape(c, h * d)
    b_vo = jnp.einsum("hk,hkd->hd",
                      params["v_b"].reshape(h, hd), o_wT).reshape(h * d)

    # Lane-aligned fused K/V' operand: [ W_vo (h*d lanes) | Wk^T (d lanes) ]
    wkv = jnp.concatenate([w_vo, params["k_w"].T], axis=1)         # (c, h*d + d)
    bkv = jnp.concatenate([b_vo, params["k_b"]])[None, :]          # (1, h*d + d)

    vecs = jnp.stack([params["lnq_w"], params["lnq_b"],
                      params["lnk_w"], params["lnk_b"],
                      params["o_b"], bq])                          # (6, c)
    return {"query": params["query"], "vecs": vecs, "wq": wq,
            "wkv": wkv, "bkv": bkv}


def attentional_pooler(x, packed):
    """x: (N, L, CONTEXT_DIM) f32 -> (N, N_QUERIES, D_MODEL) f32."""
    n, l, c = x.shape
    nq, d = packed["query"].shape
    return pl.pallas_call(
        pooler_kernel,
        out_shape=jax.ShapeDtypeStruct((n, nq, d), jnp.float32),
        in_specs=[pl.BlockSpec(memory_space=pltpu.MemorySpace.VMEM)] * 6,
        out_specs=pl.BlockSpec(memory_space=pltpu.MemorySpace.VMEM),
    )(x, packed["query"], packed["vecs"], packed["wq"],
      packed["wkv"], packed["bkv"])


def reference(x, params):
    """Pure-JAX reference replicating torch MultiheadAttention math."""
    xk = _layernorm(x, params["lnk_w"], params["lnk_b"])
    qn = _layernorm(params["query"], params["lnq_w"], params["lnq_b"])
    q = qn @ params["q_w"].T + params["q_b"]                     # (NQ, D)
    k = xk @ params["k_w"].T + params["k_b"]                     # (N, L, D)
    v = xk @ params["v_w"].T + params["v_b"]
    qh = q.reshape(N_QUERIES, N_HEAD, HEAD_DIM).transpose(1, 0, 2)      # (H,NQ,hd)
    kh = k.reshape(-1, L, N_HEAD, HEAD_DIM).transpose(0, 2, 1, 3)       # (N,H,L,hd)
    vh = v.reshape(-1, L, N_HEAD, HEAD_DIM).transpose(0, 2, 1, 3)
    s = jnp.einsum("hqd,nhkd->nhqk", qh, kh) / math.sqrt(HEAD_DIM)
    p = jax.nn.softmax(s, axis=-1)
    o = jnp.einsum("nhqk,nhkd->nhqd", p, vh)
    o = o.transpose(0, 2, 1, 3).reshape(-1, N_QUERIES, D_MODEL)
    return o @ params["o_w"].T + params["o_b"]


def make_params(key):
    ks = jax.random.split(key, 8)
    s = 0.02
    return {
        "query": jax.random.normal(ks[0], (N_QUERIES, D_MODEL), jnp.float32),
        "lnq_w": jnp.ones((D_MODEL,), jnp.float32),
        "lnq_b": jnp.zeros((D_MODEL,), jnp.float32),
        "lnk_w": jnp.ones((CONTEXT_DIM,), jnp.float32),
        "lnk_b": jnp.zeros((CONTEXT_DIM,), jnp.float32),
        "q_w": s * jax.random.normal(ks[1], (D_MODEL, D_MODEL), jnp.float32),
        "k_w": s * jax.random.normal(ks[2], (D_MODEL, CONTEXT_DIM), jnp.float32),
        "v_w": s * jax.random.normal(ks[3], (D_MODEL, CONTEXT_DIM), jnp.float32),
        "q_b": s * jax.random.normal(ks[4], (D_MODEL,), jnp.float32),
        "k_b": s * jax.random.normal(ks[5], (D_MODEL,), jnp.float32),
        "v_b": s * jax.random.normal(ks[6], (D_MODEL,), jnp.float32),
        "o_w": s * jax.random.normal(ks[7], (D_MODEL, D_MODEL), jnp.float32),
        "o_b": jnp.zeros((D_MODEL,), jnp.float32),
    }


if __name__ == "__main__":
    key = jax.random.PRNGKey(0)
    kx, kp = jax.random.split(key)
    x = jax.random.normal(kx, (N, L, CONTEXT_DIM), jnp.float32)
    params = make_params(kp)

    # Parameter packing happens exactly once, outside the per-call path.
    packed = jax.tree_util.tree_map(jax.block_until_ready, pack_params(params))

    out = jax.jit(attentional_pooler)(x, packed)
    out = jax.block_until_ready(out)

    ref = jax.block_until_ready(reference(x, params))
    np.testing.assert_allclose(np.asarray(out), np.asarray(ref),
                               atol=2e-4, rtol=2e-4)
    assert out.shape == (N, N_QUERIES, D_MODEL)
    print("KERNEL_OK")
</pallas_src>

<mosaic_0001>
module attributes {stable_mosaic.version = 11 : i64} {
  func.func @pooler_kernel(%arg0: memref<2x16x32xf32, #tpu.memory_space<vmem>>, %arg1: memref<8x32xf32, #tpu.memory_space<vmem>>, %arg2: memref<6x32xf32, #tpu.memory_space<vmem>>, %arg3: memref<32x32xf32, #tpu.memory_space<vmem>>, %arg4: memref<32x160xf32, #tpu.memory_space<vmem>>, %arg5: memref<1x160xf32, #tpu.memory_space<vmem>>, %arg6: memref<2x8x32xf32, #tpu.memory_space<vmem>>) attributes {dimension_semantics = [], scalar_prefetch = 0 : i64, scratch_operands = 0 : i64, tpu.core_type = #tpu.core_type<tc>} {
    %c0 = arith.constant 0 : index
    %c0_0 = arith.constant 0 : index
    %0 = vector.load %arg2[%c0, %c0_0] : memref<6x32xf32, #tpu.memory_space<vmem>>, vector<6x32xf32>
    %1 = vector.extract_strided_slice %0 {offsets = [0, 0], sizes = [1, 32], strides = [1, 1]} : vector<6x32xf32> to vector<1x32xf32>
    %2 = vector.extract_strided_slice %0 {offsets = [1, 0], sizes = [1, 32], strides = [1, 1]} : vector<6x32xf32> to vector<1x32xf32>
    %3 = vector.extract_strided_slice %0 {offsets = [2, 0], sizes = [1, 32], strides = [1, 1]} : vector<6x32xf32> to vector<1x32xf32>
    %4 = vector.extract_strided_slice %0 {offsets = [3, 0], sizes = [1, 32], strides = [1, 1]} : vector<6x32xf32> to vector<1x32xf32>
    %5 = vector.extract_strided_slice %0 {offsets = [4, 0], sizes = [1, 32], strides = [1, 1]} : vector<6x32xf32> to vector<1x32xf32>
    %6 = vector.extract_strided_slice %0 {offsets = [5, 0], sizes = [1, 32], strides = [1, 1]} : vector<6x32xf32> to vector<1x32xf32>
    %c0_1 = arith.constant 0 : index
    %c0_2 = arith.constant 0 : index
    %c0_3 = arith.constant 0 : index
    %7 = vector.load %arg0[%c0_1, %c0_2, %c0_3] : memref<2x16x32xf32, #tpu.memory_space<vmem>>, vector<2x16x32xf32>
    %8 = vector.shape_cast %7 : vector<2x16x32xf32> to vector<32x32xf32>
    %cst = arith.constant dense<0.000000e+00> : vector<32xf32>
    %9 = vector.multi_reduction <add>, %8, %cst [1] : vector<32x32xf32> to vector<32xf32>
    %10 = vector.shape_cast %9 : vector<32xf32> to vector<32x1xf32>
    %cst_4 = arith.constant 3.200000e+01 : f32
    %11 = vector.broadcast %cst_4 : f32 to vector<32x1xf32>
    %12 = arith.divf %10, %11 : vector<32x1xf32>
    %13 = vector.broadcast %12 : vector<32x1xf32> to vector<32x32xf32>
    %14 = arith.subf %8, %13 : vector<32x32xf32>
    %15 = arith.mulf %14, %14 : vector<32x32xf32>
    %cst_5 = arith.constant dense<0.000000e+00> : vector<32xf32>
    %16 = vector.multi_reduction <add>, %15, %cst_5 [1] : vector<32x32xf32> to vector<32xf32>
    %17 = vector.shape_cast %16 : vector<32xf32> to vector<32x1xf32>
    %cst_6 = arith.constant 3.200000e+01 : f32
    %18 = vector.broadcast %cst_6 : f32 to vector<32x1xf32>
    %19 = arith.divf %17, %18 : vector<32x1xf32>
    %20 = vector.broadcast %12 : vector<32x1xf32> to vector<32x32xf32>
    %21 = arith.subf %8, %20 : vector<32x32xf32>
    %cst_7 = arith.constant 9.99999974E-6 : f32
    %22 = vector.broadcast %cst_7 : f32 to vector<32x1xf32>
    %23 = arith.addf %19, %22 : vector<32x1xf32>
    %24 = math.rsqrt %23 : vector<32x1xf32>
    %25 = vector.broadcast %24 : vector<32x1xf32> to vector<32x32xf32>
    %26 = arith.mulf %21, %25 : vector<32x32xf32>
    %27 = vector.broadcast %3 : vector<1x32xf32> to vector<32x32xf32>
    %28 = arith.mulf %26, %27 : vector<32x32xf32>
    %29 = vector.broadcast %4 : vector<1x32xf32> to vector<32x32xf32>
    %30 = arith.addf %28, %29 : vector<32x32xf32>
    %c0_8 = arith.constant 0 : index
    %c0_9 = arith.constant 0 : index
    %31 = vector.load %arg1[%c0_8, %c0_9] : memref<8x32xf32, #tpu.memory_space<vmem>>, vector<8x32xf32>
    %cst_10 = arith.constant dense<0.000000e+00> : vector<8xf32>
    %32 = vector.multi_reduction <add>, %31, %cst_10 [1] : vector<8x32xf32> to vector<8xf32>
    %33 = vector.shape_cast %32 : vector<8xf32> to vector<8x1xf32>
    %cst_11 = arith.constant 3.200000e+01 : f32
    %34 = vector.broadcast %cst_11 : f32 to vector<8x1xf32>
    %35 = arith.divf %33, %34 : vector<8x1xf32>
    %36 = vector.broadcast %35 : vector<8x1xf32> to vector<8x32xf32>
    %37 = arith.subf %31, %36 : vector<8x32xf32>
    %38 = arith.mulf %37, %37 : vector<8x32xf32>
    %cst_12 = arith.constant dense<0.000000e+00> : vector<8xf32>
    %39 = vector.multi_reduction <add>, %38, %cst_12 [1] : vector<8x32xf32> to vector<8xf32>
    %40 = vector.shape_cast %39 : vector<8xf32> to vector<8x1xf32>
    %cst_13 = arith.constant 3.200000e+01 : f32
    %41 = vector.broadcast %cst_13 : f32 to vector<8x1xf32>
    %42 = arith.divf %40, %41 : vector<8x1xf32>
    %43 = vector.broadcast %35 : vector<8x1xf32> to vector<8x32xf32>
    %44 = arith.subf %31, %43 : vector<8x32xf32>
    %cst_14 = arith.constant 9.99999974E-6 : f32
    %45 = vector.broadcast %cst_14 : f32 to vector<8x1xf32>
    %46 = arith.addf %42, %45 : vector<8x1xf32>
    %47 = math.rsqrt %46 : vector<8x1xf32>
    %48 = vector.broadcast %47 : vector<8x1xf32> to vector<8x32xf32>
    %49 = arith.mulf %44, %48 : vector<8x32xf32>
    %50 = vector.broadcast %1 : vector<1x32xf32> to vector<8x32xf32>
    %51 = arith.mulf %49, %50 : vector<8x32xf32>
    %52 = vector.broadcast %2 : vector<1x32xf32> to vector<8x32xf32>
    %53 = arith.addf %51, %52 : vector<8x32xf32>
    %c0_15 = arith.constant 0 : index
    %c0_16 = arith.constant 0 : index
    %54 = vector.load %arg3[%c0_15, %c0_16] : memref<32x32xf32, #tpu.memory_space<vmem>>, vector<32x32xf32>
    %cst_17 = arith.constant dense<0.000000e+00> : vector<8x32xf32>
    %55 = tpu.matmul %53, %54, %cst_17 {dimension_numbers = #tpu.dot_dimension_numbers<[1], [0], [0], [1], [0, 0, 1, 1], [], []>} : vector<8x32xf32>, vector<32x32xf32>, vector<8x32xf32> -> vector<8x32xf32>
    %56 = vector.broadcast %6 : vector<1x32xf32> to vector<8x32xf32>
    %57 = arith.addf %55, %56 : vector<8x32xf32>
    %c0_18 = arith.constant 0 : index
    %c0_19 = arith.constant 0 : index
    %58 = vector.load %arg4[%c0_18, %c0_19] : memref<32x160xf32, #tpu.memory_space<vmem>>, vector<32x160xf32>
    %cst_20 = arith.constant dense<0.000000e+00> : vector<32x160xf32>
    %59 = tpu.matmul %30, %58, %cst_20 {dimension_numbers = #tpu.dot_dimension_numbers<[1], [0], [0], [1], [0, 0, 1, 1], [], []>} : vector<32x32xf32>, vector<32x160xf32>, vector<32x160xf32> -> vector<32x160xf32>
    %c0_21 = arith.constant 0 : index
    %c0_22 = arith.constant 0 : index
    %60 = vector.load %arg5[%c0_21, %c0_22] : memref<1x160xf32, #tpu.memory_space<vmem>>, vector<1x160xf32>
    %61 = vector.broadcast %60 : vector<1x160xf32> to vector<32x160xf32>
    %62 = arith.addf %59, %61 : vector<32x160xf32>
    %63 = vector.extract_strided_slice %62 {offsets = [0, 0], sizes = [32, 128], strides = [1, 1]} : vector<32x160xf32> to vector<32x128xf32>
    %64 = vector.extract_strided_slice %62 {offsets = [0, 128], sizes = [32, 32], strides = [1, 1]} : vector<32x160xf32> to vector<32x32xf32>
    %65 = vector.shape_cast %64 : vector<32x32xf32> to vector<2x16x32xf32>
    %66 = vector.shape_cast %63 : vector<32x128xf32> to vector<2x16x128xf32>
    %67 = vector.shape_cast %57 : vector<8x32xf32> to vector<1x8x32xf32>
    %68 = vector.shape_cast %67 : vector<1x8x32xf32> to vector<1x8x32xf32>
    %69 = vector.broadcast %68 : vector<1x8x32xf32> to vector<2x8x32xf32>
    %70 = vector.extract_strided_slice %69 {offsets = [0, 0, 0], sizes = [2, 8, 8], strides = [1, 1, 1]} : vector<2x8x32xf32> to vector<2x8x8xf32>
    %71 = vector.extract_strided_slice %65 {offsets = [0, 0, 0], sizes = [2, 16, 8], strides = [1, 1, 1]} : vector<2x16x32xf32> to vector<2x16x8xf32>
    %72 = vector.extract_strided_slice %66 {offsets = [0, 0, 0], sizes = [2, 16, 32], strides = [1, 1, 1]} : vector<2x16x128xf32> to vector<2x16x32xf32>
    "tpu.trace_start"() <{level = 10 : i32, message = "bqj,bkj->bqk"}> : () -> ()
    %cst_23 = arith.constant dense<0.000000e+00> : vector<2x8x16xf32>
    %73 = tpu.matmul %70, %71, %cst_23 {dimension_numbers = #tpu.dot_dimension_numbers<[2], [2], [1], [1], [0, 0, 0, 1, 1, 1], [0], [0]>} : vector<2x8x8xf32>, vector<2x16x8xf32>, vector<2x8x16xf32> -> vector<2x8x16xf32>
    "tpu.trace_stop"() : () -> ()
    %cst_24 = arith.constant dense<0xFF800000> : vector<2x8xf32>
    %74 = vector.multi_reduction <maximumf>, %73, %cst_24 [2] : vector<2x8x16xf32> to vector<2x8xf32>
    %75 = vector.shape_cast %74 : vector<2x8xf32> to vector<2x8x1xf32>
    %76 = vector.broadcast %75 : vector<2x8x1xf32> to vector<2x8x16xf32>
    %77 = arith.subf %73, %76 : vector<2x8x16xf32>
    %78 = math.exp %77 : vector<2x8x16xf32>
    %cst_25 = arith.constant dense<0.000000e+00> : vector<2x8xf32>
    %79 = vector.multi_reduction <add>, %78, %cst_25 [2] : vector<2x8x16xf32> to vector<2x8xf32>
    %80 = vector.shape_cast %79 : vector<2x8xf32> to vector<2x8x1xf32>
    %81 = tpu.reciprocal %80 {approx = true} : vector<2x8x1xf32> -> vector<2x8x1xf32>
    %82 = vector.broadcast %81 : vector<2x8x1xf32> to vector<2x8x16xf32>
    %83 = arith.mulf %78, %82 : vector<2x8x16xf32>
    "tpu.trace_start"() <{level = 10 : i32, message = "bqk,bkd->bqd"}> : () -> ()
    %cst_26 = arith.constant dense<0.000000e+00> : vector<2x8x32xf32>
    %84 = tpu.matmul %83, %72, %cst_26 {dimension_numbers = #tpu.dot_dimension_numbers<[2], [1], [1], [2], [0, 0, 0, 1, 1, 2], [0], [0]>} : vector<2x8x16xf32>, vector<2x16x32xf32>, vector<2x8x32xf32> -> vector<2x8x32xf32>
    "tpu.trace_stop"() : () -> ()
    %85 = vector.extract_strided_slice %69 {offsets = [0, 0, 8], sizes = [2, 8, 8], strides = [1, 1, 1]} : vector<2x8x32xf32> to vector<2x8x8xf32>
    %86 = vector.extract_strided_slice %65 {offsets = [0, 0, 8], sizes = [2, 16, 8], strides = [1, 1, 1]} : vector<2x16x32xf32> to vector<2x16x8xf32>
    %87 = vector.extract_strided_slice %66 {offsets = [0, 0, 32], sizes = [2, 16, 32], strides = [1, 1, 1]} : vector<2x16x128xf32> to vector<2x16x32xf32>
    "tpu.trace_start"() <{level = 10 : i32, message = "bqj,bkj->bqk"}> : () -> ()
    %cst_27 = arith.constant dense<0.000000e+00> : vector<2x8x16xf32>
    %88 = tpu.matmul %85, %86, %cst_27 {dimension_numbers = #tpu.dot_dimension_numbers<[2], [2], [1], [1], [0, 0, 0, 1, 1, 1], [0], [0]>} : vector<2x8x8xf32>, vector<2x16x8xf32>, vector<2x8x16xf32> -> vector<2x8x16xf32>
    "tpu.trace_stop"() : () -> ()
    %cst_28 = arith.constant dense<0xFF800000> : vector<2x8xf32>
    %89 = vector.multi_reduction <maximumf>, %88, %cst_28 [2] : vector<2x8x16xf32> to vector<2x8xf32>
    %90 = vector.shape_cast %89 : vector<2x8xf32> to vector<2x8x1xf32>
    %91 = vector.broadcast %90 : vector<2x8x1xf32> to vector<2x8x16xf32>
    %92 = arith.subf %88, %91 : vector<2x8x16xf32>
    %93 = math.exp %92 : vector<2x8x16xf32>
    %cst_29 = arith.constant dense<0.000000e+00> : vector<2x8xf32>
    %94 = vector.multi_reduction <add>, %93, %cst_29 [2] : vector<2x8x16xf32> to vector<2x8xf32>
    %95 = vector.shape_cast %94 : vector<2x8xf32> to vector<2x8x1xf32>
    %96 = tpu.reciprocal %95 {approx = true} : vector<2x8x1xf32> -> vector<2x8x1xf32>
    %97 = vector.broadcast %96 : vector<2x8x1xf32> to vector<2x8x16xf32>
    %98 = arith.mulf %93, %97 : vector<2x8x16xf32>
    "tpu.trace_start"() <{level = 10 : i32, message = "bqk,bkd->bqd"}> : () -> ()
    %cst_30 = arith.constant dense<0.000000e+00> : vector<2x8x32xf32>
    %99 = tpu.matmul %98, %87, %cst_30 {dimension_numbers = #tpu.dot_dimension_numbers<[2], [1], [1], [2], [0, 0, 0, 1, 1, 2], [0], [0]>} : vector<2x8x16xf32>, vector<2x16x32xf32>, vector<2x8x32xf32> -> vector<2x8x32xf32>
    "tpu.trace_stop"() : () -> ()
    %100 = arith.addf %84, %99 : vector<2x8x32xf32>
    %101 = vector.extract_strided_slice %69 {offsets = [0, 0, 16], sizes = [2, 8, 8], strides = [1, 1, 1]} : vector<2x8x32xf32> to vector<2x8x8xf32>
    %102 = vector.extract_strided_slice %65 {offsets = [0, 0, 16], sizes = [2, 16, 8], strides = [1, 1, 1]} : vector<2x16x32xf32> to vector<2x16x8xf32>
    %103 = vector.extract_strided_slice %66 {offsets = [0, 0, 64], sizes = [2, 16, 32], strides = [1, 1, 1]} : vector<2x16x128xf32> to vector<2x16x32xf32>
    "tpu.trace_start"() <{level = 10 : i32, message = "bqj,bkj->bqk"}> : () -> ()
    %cst_31 = arith.constant dense<0.000000e+00> : vector<2x8x16xf32>
    %104 = tpu.matmul %101, %102, %cst_31 {dimension_numbers = #tpu.dot_dimension_numbers<[2], [2], [1], [1], [0, 0, 0, 1, 1, 1], [0], [0]>} : vector<2x8x8xf32>, vector<2x16x8xf32>, vector<2x8x16xf32> -> vector<2x8x16xf32>
    "tpu.trace_stop"() : () -> ()
    %cst_32 = arith.constant dense<0xFF800000> : vector<2x8xf32>
    %105 = vector.multi_reduction <maximumf>, %104, %cst_32 [2] : vector<2x8x16xf32> to vector<2x8xf32>
    %106 = vector.shape_cast %105 : vector<2x8xf32> to vector<2x8x1xf32>
    %107 = vector.broadcast %106 : vector<2x8x1xf32> to vector<2x8x16xf32>
    %108 = arith.subf %104, %107 : vector<2x8x16xf32>
    %109 = math.exp %108 : vector<2x8x16xf32>
    %cst_33 = arith.constant dense<0.000000e+00> : vector<2x8xf32>
    %110 = vector.multi_reduction <add>, %109, %cst_33 [2] : vector<2x8x16xf32> to vector<2x8xf32>
    %111 = vector.shape_cast %110 : vector<2x8xf32> to vector<2x8x1xf32>
    %112 = tpu.reciprocal %111 {approx = true} : vector<2x8x1xf32> -> vector<2x8x1xf32>
    %113 = vector.broadcast %112 : vector<2x8x1xf32> to vector<2x8x16xf32>
    %114 = arith.mulf %109, %113 : vector<2x8x16xf32>
    "tpu.trace_start"() <{level = 10 : i32, message = "bqk,bkd->bqd"}> : () -> ()
    %cst_34 = arith.constant dense<0.000000e+00> : vector<2x8x32xf32>
    %115 = tpu.matmul %114, %103, %cst_34 {dimension_numbers = #tpu.dot_dimension_numbers<[2], [1], [1], [2], [0, 0, 0, 1, 1, 2], [0], [0]>} : vector<2x8x16xf32>, vector<2x16x32xf32>, vector<2x8x32xf32> -> vector<2x8x32xf32>
    "tpu.trace_stop"() : () -> ()
    %116 = arith.addf %100, %115 : vector<2x8x32xf32>
    %117 = vector.extract_strided_slice %69 {offsets = [0, 0, 24], sizes = [2, 8, 8], strides = [1, 1, 1]} : vector<2x8x32xf32> to vector<2x8x8xf32>
    %118 = vector.extract_strided_slice %65 {offsets = [0, 0, 24], sizes = [2, 16, 8], strides = [1, 1, 1]} : vector<2x16x32xf32> to vector<2x16x8xf32>
    %119 = vector.extract_strided_slice %66 {offsets = [0, 0, 96], sizes = [2, 16, 32], strides = [1, 1, 1]} : vector<2x16x128xf32> to vector<2x16x32xf32>
    "tpu.trace_start"() <{level = 10 : i32, message = "bqj,bkj->bqk"}> : () -> ()
    %cst_35 = arith.constant dense<0.000000e+00> : vector<2x8x16xf32>
    %120 = tpu.matmul %117, %118, %cst_35 {dimension_numbers = #tpu.dot_dimension_numbers<[2], [2], [1], [1], [0, 0, 0, 1, 1, 1], [0], [0]>} : vector<2x8x8xf32>, vector<2x16x8xf32>, vector<2x8x16xf32> -> vector<2x8x16xf32>
    "tpu.trace_stop"() : () -> ()
    %cst_36 = arith.constant dense<0xFF800000> : vector<2x8xf32>
    %121 = vector.multi_reduction <maximumf>, %120, %cst_36 [2] : vector<2x8x16xf32> to vector<2x8xf32>
    %122 = vector.shape_cast %121 : vector<2x8xf32> to vector<2x8x1xf32>
    %123 = vector.broadcast %122 : vector<2x8x1xf32> to vector<2x8x16xf32>
    %124 = arith.subf %120, %123 : vector<2x8x16xf32>
    %125 = math.exp %124 : vector<2x8x16xf32>
    %cst_37 = arith.constant dense<0.000000e+00> : vector<2x8xf32>
    %126 = vector.multi_reduction <add>, %125, %cst_37 [2] : vector<2x8x16xf32> to vector<2x8xf32>
    %127 = vector.shape_cast %126 : vector<2x8xf32> to vector<2x8x1xf32>
    %128 = tpu.reciprocal %127 {approx = true} : vector<2x8x1xf32> -> vector<2x8x1xf32>
    %129 = vector.broadcast %128 : vector<2x8x1xf32> to vector<2x8x16xf32>
    %130 = arith.mulf %125, %129 : vector<2x8x16xf32>
    "tpu.trace_start"() <{level = 10 : i32, message = "bqk,bkd->bqd"}> : () -> ()
    %cst_38 = arith.constant dense<0.000000e+00> : vector<2x8x32xf32>
    %131 = tpu.matmul %130, %119, %cst_38 {dimension_numbers = #tpu.dot_dimension_numbers<[2], [1], [1], [2], [0, 0, 0, 1, 1, 2], [0], [0]>} : vector<2x8x16xf32>, vector<2x16x32xf32>, vector<2x8x32xf32> -> vector<2x8x32xf32>
    "tpu.trace_stop"() : () -> ()
    %132 = arith.addf %116, %131 : vector<2x8x32xf32>
    %133 = vector.shape_cast %5 : vector<1x32xf32> to vector<1x1x32xf32>
    %134 = vector.broadcast %133 : vector<1x1x32xf32> to vector<2x8x32xf32>
    %135 = arith.addf %132, %134 : vector<2x8x32xf32>
    %c0_39 = arith.constant 0 : index
    %c0_40 = arith.constant 0 : index
    %c0_41 = arith.constant 0 : index
    %136 = vector.load %arg6[%c0_39, %c0_40, %c0_41] : memref<2x8x32xf32, #tpu.memory_space<vmem>>, vector<2x8x32xf32>
    tpu.vector_store %arg6[%c0_39, %c0_40, %c0_41], %135 {strides = array<i32>} : memref<2x8x32xf32, #tpu.memory_space<vmem>>, vector<2x8x32xf32>,
    return
  }
}

</mosaic_0001>

<llo_original>
// kernel: attentional_pooler.1
$region0: #{attentional_pooler.1}
  #allocation0 [shape = 'u32[]', space=smem, size = 0x4, offset = 0x4, fixed_abs, tag = 'smem constant byte address 0x4 - core index']
  #allocation1 [shape = 'u32[72,128]{1,0:T(1,128)}', space=vmem, size = 0x9000, scoped, tag = 'internal scratch']
  %s0 = inlined_call_operand.hbm [shape: f32[2,16,32], index: 0, kind: input, shape index: {}]
  %s1 = inlined_call_operand.hbm [shape: f32[8,32], index: 1, kind: input, shape index: {}]
  %s2 = inlined_call_operand.hbm [shape: f32[6,32], index: 2, kind: input, shape index: {}]
  %s3 = inlined_call_operand.hbm [shape: f32[32,32], index: 3, kind: input, shape index: {}]
  %s4 = inlined_call_operand.hbm [shape: f32[32,160], index: 4, kind: input, shape index: {}]
  %s5 = inlined_call_operand.hbm [shape: f32[1,160], index: 5, kind: input, shape index: {}]
  %s6 = inlined_call_operand.hbm [shape: f32[2,8,32], index: 6, kind: output, shape index: {}]
  %s7 = sld [smem:[#allocation0]]
  $region58: #{attentional_pooler.1} parent=0
    _
  %s9 = ssub.s32 1, %s7
  %s10 = scalar_select 0, %s9, %s7
  $region1: #{attentional_pooler.1} parent=0
    #allocation2 [shape = 'u8[16384]{0}', space=vmem, size = 0x4000, scoped, tag = 'input window, operand 0, single buffered']
    #allocation3 [shape = 's32[1]{0}', space=sflag, size = 0x4, scoped, tag = 'scoped memory for attentional_pooler.1']
    #allocation4 [shape = 's32[1]{0}', space=sflag, size = 0x4, scoped, tag = 'scoped memory for attentional_pooler.1']
    #allocation5 [shape = 'u8[4096]{0}', space=vmem, size = 0x1000, scoped, tag = 'input window, operand 1, single buffered']
    #allocation6 [shape = 's32[1]{0}', space=sflag, size = 0x4, scoped, tag = 'scoped memory for attentional_pooler.1']
    #allocation7 [shape = 'u8[4096]{0}', space=vmem, size = 0x1000, scoped, tag = 'input window, operand 2, single buffered']
    #allocation8 [shape = 'u8[16384]{0}', space=vmem, size = 0x4000, scoped, tag = 'input window, operand 3, single buffered']
    #allocation9 [shape = 's32[1]{0}', space=sflag, size = 0x4, scoped, tag = 'scoped memory for attentional_pooler.1']
    #allocation10 [shape = 'u8[32768]{0}', space=vmem, size = 0x8000, scoped, tag = 'input window, operand 4, single buffered']
    #allocation11 [shape = 'u8[1024]{0}', space=vmem, size = 0x400, scoped, tag = 'input window, operand 5, single buffered']
    #allocation12 [shape = 's32[1]{0}', space=sflag, size = 0x4, scoped, tag = 'scoped memory for attentional_pooler.1']
    #allocation13 [shape = 'u8[8192]{0}', space=vmem, size = 0x2000, scoped, tag = 'output window, operand 0, single buffered']
    %11 = vsyncpa [#allocation3], 0
    %12 = vsyncpa [#allocation6], 0
    %13 = vsyncpa [#allocation9], 0
    %14 = vsyncpa [#allocation12], 0
    %15 = vsyncpa [#allocation4], 0
    // Predicated region
    $region2: #{attentional_pooler.1} parent=1 // pred_check
      _
    $region3: #{attentional_pooler.1} parent=1 // pred_check_branch
      %17 = sbr.rel (0) target = $region5
    $region4: #{attentional_pooler.1} parent=1 // pred_region
      %19 = vsyncadd [#allocation3], 0
      %s20 = sshll.u32 %s0, 4
      %s21 = int_to_ptr.hbm [resolvable:$true] %s20
      %s22 = sshll.u32 [#allocation2], 4
      %s23 = int_to_ptr.vmem [resolvable:$true] %s22
      %28 = dma.hbm_to_vmem [thread:$0]  %s21, 512, %s23, [#allocation3], 128, 128, 8
    $region5: #{attentional_pooler.1} parent=1 // pred_fallthru
      _
    // Predicated region
    $region6: #{attentional_pooler.1} parent=1 // pred_check
      _
    $region7: #{attentional_pooler.1} parent=1 // pred_check_branch
      %30 = sbr.rel (0) target = $region9
    $region8: #{attentional_pooler.1} parent=1 // pred_region
      %32 = vsyncadd [#allocation6], 0
      %s34 = sshll.u32 %s1, 4
      %s35 = int_to_ptr.hbm [resolvable:$true] %s34
      %s36 = sshll.u32 [#allocation5], 4
      %s37 = int_to_ptr.vmem [resolvable:$true] %s36
      %39 = dma.hbm_to_vmem [thread:$0]  %s35, 128, %s37, [#allocation6]
    $region9: #{attentional_pooler.1} parent=1 // pred_fallthru
      _
    // Predicated region
    $region10: #{attentional_pooler.1} parent=1 // pred_check
      _
    $region11: #{attentional_pooler.1} parent=1 // pred_check_branch
      %41 = sbr.rel (0) target = $region13
    $region12: #{attentional_pooler.1} parent=1 // pred_region
      %43 = vsyncadd [#allocation6], 0
      %s45 = sshll.u32 %s2, 4
      %s46 = int_to_ptr.hbm [resolvable:$true] %s45
      %s47 = sshll.u32 [#allocation7], 4
      %s48 = int_to_ptr.vmem [resolvable:$true] %s47
      %50 = dma.hbm_to_vmem [thread:$0]  %s46, 128, %s48, [#allocation6]
    $region13: #{attentional_pooler.1} parent=1 // pred_fallthru
      _
    // Predicated region
    $region14: #{attentional_pooler.1} parent=1 // pred_check
      _
    $region15: #{attentional_pooler.1} parent=1 // pred_check_branch
      %52 = sbr.rel (0) target = $region17
    $region16: #{attentional_pooler.1} parent=1 // pred_region
      %54 = vsyncadd [#allocation9], 0
      %s55 = sshll.u32 %s3, 4
      %s56 = int_to_ptr.hbm [resolvable:$true] %s55
      %s57 = sshll.u32 [#allocation8], 4
      %s58 = int_to_ptr.vmem [resolvable:$true] %s57
      %63 = dma.hbm_to_vmem [thread:$0]  %s56, 512, %s58, [#allocation9], 128, 128, 8
    $region17: #{attentional_pooler.1} parent=1 // pred_fallthru
      _
    // Predicated region
    $region18: #{attentional_pooler.1} parent=1 // pred_check
      _
    $region19: #{attentional_pooler.1} parent=1 // pred_check_branch
      %65 = sbr.rel (0) target = $region21
    $region20: #{attentional_pooler.1} parent=1 // pred_region
      %67 = vsyncadd [#allocation9], 0
      %s68 = sshll.u32 %s4, 4
      %s69 = int_to_ptr.hbm [resolvable:$true] %s68
      %s70 = sshll.u32 [#allocation10], 4
      %s71 = int_to_ptr.vmem [resolvable:$true] %s70
      %76 = dma.hbm_to_vmem [thread:$0]  %s69, 1024, %s71, [#allocation9], 256, 256, 16
    $region21: #{attentional_pooler.1} parent=1 // pred_fallthru
      _
    // Predicated region
    $region22: #{attentional_pooler.1} parent=1 // pred_check
      _
    $region23: #{attentional_pooler.1} parent=1 // pred_check_branch
      %78 = sbr.rel (0) target = $region25
    $region24: #{attentional_pooler.1} parent=1 // pred_region
      %80 = vsyncadd [#allocation12], 0
      %s82 = sshll.u32 %s5, 4
      %s83 = int_to_ptr.hbm [resolvable:$true] %s82
      %s84 = sshll.u32 [#allocation11], 4
      %s85 = int_to_ptr.vmem [resolvable:$true] %s84
      %87 = dma.hbm_to_vmem [thread:$0]  %s83, 32, %s85, [#allocation12]
    $region25: #{attentional_pooler.1} parent=1 // pred_fallthru
      _
    // Predicated region
    $region26: #{attentional_pooler.1} parent=1 // pred_check
      _
    $region27: #{attentional_pooler.1} parent=1 // pred_check_branch
      %89 = sbr.rel (0) target = $region29
    $region28: #{attentional_pooler.1} parent=1 // pred_region
      %91 = dma.done [#allocation3], 512
    $region29: #{attentional_pooler.1} parent=1 // pred_fallthru
      _
    // Predicated region
    $region30: #{attentional_pooler.1} parent=1 // pred_check
      _
    $region31: #{attentional_pooler.1} parent=1 // pred_check_branch
      %93 = sbr.rel (0) target = $region33
    $region32: #{attentional_pooler.1} parent=1 // pred_region
      %95 = dma.done [#allocation6], 128
    $region33: #{attentional_pooler.1} parent=1 // pred_fallthru
      _
    // Predicated region
    $region34: #{attentional_pooler.1} parent=1 // pred_check
      _
    $region35: #{attentional_pooler.1} parent=1 // pred_check_branch
      %97 = sbr.rel (0) target = $region37
    $region36: #{attentional_pooler.1} parent=1 // pred_region
      %99 = dma.done [#allocation6], 128
    $region37: #{attentional_pooler.1} parent=1 // pred_fallthru
      _
    // Predicated region
    $region38: #{attentional_pooler.1} parent=1 // pred_check
      _
    $region39: #{attentional_pooler.1} parent=1 // pred_check_branch
      %101 = sbr.rel (0) target = $region41
    $region40: #{attentional_pooler.1} parent=1 // pred_region
      %103 = dma.done [#allocation9], 512
    $region41: #{attentional_pooler.1} parent=1 // pred_fallthru
      _
    // Predicated region
    $region42: #{attentional_pooler.1} parent=1 // pred_check
      _
    $region43: #{attentional_pooler.1} parent=1 // pred_check_branch
      %105 = sbr.rel (0) target = $region45
    $region44: #{attentional_pooler.1} parent=1 // pred_region
      %107 = dma.done [#allocation9], 1024
    $region45: #{attentional_pooler.1} parent=1 // pred_fallthru
      _
    // Predicated region
    $region46: #{attentional_pooler.1} parent=1 // pred_check
      _
    $region47: #{attentional_pooler.1} parent=1 // pred_check_branch
      %109 = sbr.rel (0) target = $region49
    $region48: #{attentional_pooler.1} parent=1 // pred_region
      %111 = dma.done [#allocation12], 32
    $region49: #{attentional_pooler.1} parent=1 // pred_fallthru
      _
    %v112 = vld [vmem:[#allocation7] sm:$0x3f]
    %v113 = vld [vmem:[#allocation2] sm:$0xff]
    %v114 = vld [vmem:[#allocation2 + $0x8] sm:$0xff]
    %v115 = vld [vmem:[#allocation2 + $0x10] sm:$0xff]
    %v116 = vld [vmem:[#allocation2 + $0x18] sm:$0xff]
    %vm117 = vcmask 261120
    %v118 = vsel %vm117, %v113, 0.0
    %119 = vadd.xlane.f32.xlu0 %v118
    %v120 = vpop.xlane.xlu0 %119
    %v121 = vsel %vm117, %v114, 0.0
    %122 = vadd.xlane.f32.xlu0 %v121
    %v123 = vpop.xlane.xlu0 %122
    %v124 = vsel %vm117, %v115, 0.0
    %125 = vadd.xlane.f32.xlu0 %v124
    %v126 = vpop.xlane.xlu0 %125
    %v127 = vsel %vm117, %v116, 0.0
    %128 = vadd.xlane.f32.xlu0 %v127
    %v129 = vpop.xlane.xlu0 %128
    %v130 = vrcp.pop 32.0
    %v131 = vmul.f32 32.0, %v130
    %v132 = vsub.f32 1.0, %v131
    %v133 = vmul.f32 %v130, %v132
    %v134 = vadd.f32 %v130, %v133
    %vm135 = vweird.f32 %v130
    %v136 = vsel %vm135, %v130, %v134
    %v137 = vmul.f32 %v120, %v136
    %v138 = vmul.f32 %v123, %v136
    %v139 = vmul.f32 %v126, %v136
    %v140 = vmul.f32 %v129, %v136
    %v141 = vsub.f32 %v113, %v137
    %v142 = vsub.f32 %v114, %v138
    %v143 = vsub.f32 %v115, %v139
    %v144 = vsub.f32 %v116, %v140
    %v145 = vmul.f32 %v141, %v141
    %v146 = vmul.f32 %v142, %v142
    %v147 = vmul.f32 %v143, %v143
    %v148 = vmul.f32 %v144, %v144
    %v149 = vsel %vm117, %v145, 0.0
    %150 = vadd.xlane.f32.xlu0 %v149
    %v151 = vpop.xlane.xlu0 %150
    %v152 = vsel %vm117, %v146, 0.0
    %153 = vadd.xlane.f32.xlu0 %v152
    %v154 = vpop.xlane.xlu0 %153
    %v155 = vsel %vm117, %v147, 0.0
    %156 = vadd.xlane.f32.xlu0 %v155
    %v157 = vpop.xlane.xlu0 %156
    %v158 = vsel %vm117, %v148, 0.0
    %159 = vadd.xlane.f32.xlu0 %v158
    %v160 = vpop.xlane.xlu0 %159
    %v161 = vmul.f32 %v151, %v136
    %v162 = vmul.f32 %v154, %v136
    %v163 = vmul.f32 %v157, %v136
    %v164 = vmul.f32 %v160, %v136
    %v165 = vadd.f32 %v161, 1e-05
    %v166 = vadd.f32 %v162, 1e-05
    %v167 = vadd.f32 %v163, 1e-05
    %v168 = vadd.f32 %v164, 1e-05
    %v169 = vrsqrt.pop %v165
    %v170 = vmul.f32 %v169, %v165
    %v171 = vmul.f32 %v170, %v169
    %v172 = vmul.f32 0.5, %v171
    %v173 = vsub.f32 1.5, %v172
    %v174 = vmul.f32 %v169, %v173
    %vm175 = vweird.f32 %v165
    %vm176 = vweird.f32 %v169
    %vm177 = vmor %vm175, %vm176
    %v178 = vsel %vm177, %v169, %v174
    %v179 = vrsqrt.pop %v166
    %v180 = vmul.f32 %v179, %v166
    %v181 = vmul.f32 %v180, %v179
    %v182 = vmul.f32 0.5, %v181
    %v183 = vsub.f32 1.5, %v182
    %v184 = vmul.f32 %v179, %v183
    %vm185 = vweird.f32 %v166
    %vm186 = vweird.f32 %v179
    %vm187 = vmor %vm185, %vm186
    %v188 = vsel %vm187, %v179, %v184
    %v189 = vrsqrt.pop %v167
    %v190 = vmul.f32 %v189, %v167
    %v191 = vmul.f32 %v190, %v189
    %v192 = vmul.f32 0.5, %v191
    %v193 = vsub.f32 1.5, %v192
    %v194 = vmul.f32 %v189, %v193
    %vm195 = vweird.f32 %v167
    %vm196 = vweird.f32 %v189
    %vm197 = vmor %vm195, %vm196
    %v198 = vsel %vm197, %v189, %v194
    %v199 = vrsqrt.pop %v168
    %v200 = vmul.f32 %v199, %v168
    %v201 = vmul.f32 %v200, %v199
    %v202 = vmul.f32 0.5, %v201
    %v203 = vsub.f32 1.5, %v202
    %v204 = vmul.f32 %v199, %v203
    %vm205 = vweird.f32 %v168
    %vm206 = vweird.f32 %v199
    %vm207 = vmor %vm205, %vm206
    %v208 = vsel %vm207, %v199, %v204
    %v209 = vmul.f32 %v141, %v178
    %v210 = vmul.f32 %v142, %v188
    %v211 = vmul.f32 %v143, %v198
    %v212 = vmul.f32 %v144, %v208
    %v213 = vperm.slane %v112, 2
    %v214 = vmul.f32 %v209, %v213
    %v215 = vmul.f32 %v210, %v213
    %v216 = vmul.f32 %v211, %v213
    %v217 = vmul.f32 %v212, %v213
    %v218 = vperm.slane %v112, 3
    %v219 = vadd.f32 %v214, %v218
    %v220 = vadd.f32 %v215, %v218
    %v221 = vadd.f32 %v216, %v218
    %v222 = vadd.f32 %v217, %v218
    %v223 = vld [vmem:[#allocation5] sm:$0xff]
    %v224 = vsel %vm117, %v223, 0.0
    %225 = vadd.xlane.f32.xlu0 %v224
    %v226 = vpop.xlane.xlu0 %225
    %v227 = vmul.f32 %v226, %v136
    %v228 = vsub.f32 %v223, %v227
    %v229 = vmul.f32 %v228, %v228
    %v230 = vsel %vm117, %v229, 0.0
    %231 = vadd.xlane.f32.xlu0 %v230
    %v232 = vpop.xlane.xlu0 %231
    %v233 = vmul.f32 %v232, %v136
    %v234 = vadd.f32 %v233, 1e-05
    %v235 = vrsqrt.pop %v234
    %v236 = vmul.f32 %v235, %v234
    %v237 = vmul.f32 %v236, %v235
    %v238 = vmul.f32 0.5, %v237
    %v239 = vsub.f32 1.5, %v238
    %v240 = vmul.f32 %v235, %v239
    %vm241 = vweird.f32 %v234
    %vm242 = vweird.f32 %v235
    %vm243 = vmor %vm241, %vm242
    %v244 = vsel %vm243, %v235, %v240
    %v245 = vmul.f32 %v228, %v244
    %v246 = vperm.slane %v112, 0
    %v247 = vmul.f32 %v245, %v246
    %v248 = vperm.slane %v112, 1
    %v249 = vadd.f32 %v247, %v248
    %v250 = vld [vmem:[#allocation8] sm:$0xff]
    %v251 = vld [vmem:[#allocation8 + $0x8] sm:$0xff]
    %v252 = vld [vmem:[#allocation8 + $0x10] sm:$0xff]
    %v253 = vld [vmem:[#allocation8 + $0x18] sm:$0xff]
    %v254 = vperm.slane %v112, 5
    %v256 = vsel %vm117, %v249, 0
    %258 = vmatpush.msra.mxu0 0.0
    %259 = vmatpush.msra.mxu0 0.0
    %260 = vmatpush.msra.mxu0 0.0
    %261 = vmatpush.msra.mxu0 0.0
    %262 = vmatpush.msra.mxu0 0.0
    %263 = vmatpush.msra.mxu0 0.0
    %264 = vmatpush.msra.mxu0 0.0
    %265 = vmatpush.msra.mxu0 0.0
    %266 = vmatpush.msra.mxu0 0.0
    %267 = vmatpush.msra.mxu0 0.0
    %268 = vmatpush.msra.mxu0 0.0
    %269 = vmatpush.msra.mxu0 0.0
    %270 = vmatpush.msra.mxu0 %v253
    %271 = vmatpush.msra.mxu0 %v252
    %272 = vmatpush.msra.mxu0 %v251
    %273 = vmatpush.msra.mxu0 %v250
    %274 = vmatmul.f32.gmra.mxu0 %v256
    %v275 = vpop.f32.mrf.mxu0
    %v276 = vadd.f32 %v254, %v275
    %277 = vdwg.mxu0
    %v278 = vld [vmem:[#allocation10] sm:$0xff]
    %v279 = vld [vmem:[#allocation10 + $0x8] sm:$0xff]
    %v280 = vld [vmem:[#allocation10 + $0x10] sm:$0xff]
    %v281 = vld [vmem:[#allocation10 + $0x18] sm:$0xff]
    %v282 = vld [vmem:[#allocation10 + $0x20] sm:$0xff]
    %v283 = vld [vmem:[#allocation10 + $0x28] sm:$0xff]
    %v284 = vld [vmem:[#allocation10 + $0x30] sm:$0xff]
    %v285 = vld [vmem:[#allocation10 + $0x38] sm:$0xff]
    %v286 = vld [vmem:[#allocation11] sm:$0x3]
    %v288 = vperm.slane %v286, 0
    %v289 = vperm.slane %v286, 1
    %v293 = vsel %vm117, %v219, 0
    %v296 = vsel %vm117, %v220, 0
    %v299 = vsel %vm117, %v221, 0
    %v302 = vsel %vm117, %v222, 0
    %304 = vmatpush.msra.mxu0 0.0
    %305 = vmatpush.msra.mxu0 0.0
    %306 = vmatpush.msra.mxu0 0.0
    %307 = vmatpush.msra.mxu0 0.0
    %308 = vmatpush.msra.mxu0 0.0
    %309 = vmatpush.msra.mxu0 0.0
    %310 = vmatpush.msra.mxu0 0.0
    %311 = vmatpush.msra.mxu0 0.0
    %312 = vmatpush.msra.mxu0 0.0
    %313 = vmatpush.msra.mxu0 0.0
    %314 = vmatpush.msra.mxu0 0.0
    %315 = vmatpush.msra.mxu0 0.0
    %316 = vmatpush.msra.mxu0 %v284
    %317 = vmatpush.msra.mxu0 %v282
    %318 = vmatpush.msra.mxu0 %v280
    %319 = vmatpush.msra.mxu0 %v278
    %320 = vmatmul.f32.gmra.mxu0 %v293
    %v321 = vpop.f32.mrf.mxu0
    %v322 = vadd.f32 %v288, %v321
    %323 = vmatmul.f32.gmra.mxu0 %v296
    %v324 = vpop.f32.mrf.mxu0
    %v325 = vadd.f32 %v288, %v324
    %326 = vmatmul.f32.gmra.mxu0 %v299
    %v327 = vpop.f32.mrf.mxu0
    %v328 = vadd.f32 %v288, %v327
    %329 = vmatmul.f32.gmra.mxu0 %v302
    %v330 = vpop.f32.mrf.mxu0
    %v331 = vadd.f32 %v288, %v330
    %332 = vdwg.mxu0
    %333 = vmatpush.msra.mxu0 0.0
    %334 = vmatpush.msra.mxu0 0.0
    %335 = vmatpush.msra.mxu0 0.0
    %336 = vmatpush.msra.mxu0 0.0
    %337 = vmatpush.msra.mxu0 0.0
    %338 = vmatpush.msra.mxu0 0.0
    %339 = vmatpush.msra.mxu0 0.0
    %340 = vmatpush.msra.mxu0 0.0
    %341 = vmatpush.msra.mxu0 0.0
    %342 = vmatpush.msra.mxu0 0.0
    %343 = vmatpush.msra.mxu0 0.0
    %344 = vmatpush.msra.mxu0 0.0
    %345 = vmatpush.msra.mxu0 %v285
    %346 = vmatpush.msra.mxu0 %v283
    %347 = vmatpush.msra.mxu0 %v281
    %348 = vmatpush.msra.mxu0 %v279
    %349 = vmatmul.f32.gmra.mxu0 %v293
    %v350 = vpop.f32.mrf.mxu0
    %v351 = vadd.f32 %v289, %v350
    %352 = vmatmul.f32.gmra.mxu0 %v296
    %v353 = vpop.f32.mrf.mxu0
    %v354 = vadd.f32 %v289, %v353
    %355 = vmatmul.f32.gmra.mxu0 %v299
    %v356 = vpop.f32.mrf.mxu0
    %v357 = vadd.f32 %v289, %v356
    %358 = vmatmul.f32.gmra.mxu0 %v302
    %v359 = vpop.f32.mrf.mxu0
    %v360 = vadd.f32 %v289, %v359
    %361 = vdwg.mxu0
    %vm362 = vcmask 64512
    %v364 = vsel %vm362, %v276, 0
    %v367 = vsel %vm362, %v351, 0
    %v370 = vsel %vm362, %v354, 0
    %372 = vmatpush.xpose.msra.mxu0 0.0
    %373 = vmatpush.xpose.msra.mxu0 0.0
    %374 = vmatpush.xpose.msra.mxu0 0.0
    %375 = vmatpush.xpose.msra.mxu0 0.0
    %376 = vmatpush.xpose.msra.mxu0 0.0
    %377 = vmatpush.xpose.msra.mxu0 0.0
    %378 = vmatpush.xpose.msra.mxu0 0.0
    %379 = vmatpush.xpose.msra.mxu0 0.0
    %380 = vmatpush.xpose.msra.mxu0 0.0
    %381 = vmatpush.xpose.msra.mxu0 0.0
    %382 = vmatpush.xpose.msra.mxu0 0.0
    %383 = vmatpush.xpose.msra.mxu0 0.0
    %384 = vmatpush.xpose.msra.mxu0 0.0
    %385 = vmatpush.xpose.msra.mxu0 0.0
    %386 = vmatpush.xpose.msra.mxu0 %v370
    %387 = vmatpush.xpose.msra.mxu0 %v367
    %388 = vmatmul.f32.gmra.mxu0 %v364
    %v389 = vpop.f32.mrf.mxu0
    %v390 = vadd.f32 0.0, %v389
    %391 = vdwg.mxu0
    %v393 = vsel %vm362, %v357, 0
    %v396 = vsel %vm362, %v360, 0
    %398 = vmatpush.xpose.msra.mxu0 0.0
    %399 = vmatpush.xpose.msra.mxu0 0.0
    %400 = vmatpush.xpose.msra.mxu0 0.0
    %401 = vmatpush.xpose.msra.mxu0 0.0
    %402 = vmatpush.xpose.msra.mxu0 0.0
    %403 = vmatpush.xpose.msra.mxu0 0.0
    %404 = vmatpush.xpose.msra.mxu0 0.0
    %405 = vmatpush.xpose.msra.mxu0 0.0
    %406 = vmatpush.xpose.msra.mxu0 0.0
    %407 = vmatpush.xpose.msra.mxu0 0.0
    %408 = vmatpush.xpose.msra.mxu0 0.0
    %409 = vmatpush.xpose.msra.mxu0 0.0
    %410 = vmatpush.xpose.msra.mxu0 0.0
    %411 = vmatpush.xpose.msra.mxu0 0.0
    %412 = vmatpush.xpose.msra.mxu0 %v396
    %413 = vmatpush.xpose.msra.mxu0 %v393
    %414 = vmatmul.f32.gmra.mxu0 %v364
    %v415 = vpop.f32.mrf.mxu0
    %v416 = vadd.f32 0.0, %v415
    %417 = vdwg.mxu0
    %vm418 = vcmask 130048
    %v419 = vsel %vm418, %v390, -inf
    %420 = vmax.xlane.f32.xlu0 %v419
    %v421 = vpop.xlane.xlu0 %420
    %v422 = vsel %vm418, %v416, -inf
    %423 = vmax.xlane.f32.xlu0 %v422
    %v424 = vpop.xlane.xlu0 %423
    %v425 = vsub.f32 %v390, %v421
    %v426 = vsub.f32 %v416, %v424
    %v427 = vmul.f32 %v425, 1.442695
    %v428 = vpow.pop %v427
    %v429 = vmul.f32 %v426, 1.442695
    %v430 = vpow.pop %v429
    %v431 = vsel %vm418, %v428, 0.0
    %432 = vadd.xlane.f32.xlu0 %v431
    %v433 = vpop.xlane.xlu0 %432
    %v434 = vsel %vm418, %v430, 0.0
    %435 = vadd.xlane.f32.xlu0 %v434
    %v436 = vpop.xlane.xlu0 %435
    %v437 = vrcp.pop %v433
    %v438 = vrcp.pop %v436
    %v439 = vmul.f32 %v428, %v437
    %v440 = vmul.f32 %v430, %v438
    %441 = vrot.lane.b32.xlu0 %v276, 120
    %v442 = vpop.permute.xlu0 %441
    %443 = vrot.lane.b32.xlu0 %v351, 120
    %v444 = vpop.permute.xlu0 %443
    %445 = vrot.lane.b32.xlu0 %v354, 120
    %v446 = vpop.permute.xlu0 %445
    %v447 = vsel %vm362, %v442, 0
    %v449 = vsel %vm362, %v444, 0
    %v451 = vsel %vm362, %v446, 0
    %453 = vmatpush.xpose.msra.mxu0 0.0
    %454 = vmatpush.xpose.msra.mxu0 0.0
    %455 = vmatpush.xpose.msra.mxu0 0.0
    %456 = vmatpush.xpose.msra.mxu0 0.0
    %457 = vmatpush.xpose.msra.mxu0 0.0
    %458 = vmatpush.xpose.msra.mxu0 0.0
    %459 = vmatpush.xpose.msra.mxu0 0.0
    %460 = vmatpush.xpose.msra.mxu0 0.0
    %461 = vmatpush.xpose.msra.mxu0 0.0
    %462 = vmatpush.xpose.msra.mxu0 0.0
    %463 = vmatpush.xpose.msra.mxu0 0.0
    %464 = vmatpush.xpose.msra.mxu0 0.0
    %465 = vmatpush.xpose.msra.mxu0 0.0
    %466 = vmatpush.xpose.msra.mxu0 0.0
    %467 = vmatpush.xpose.msra.mxu0 %v451
    %468 = vmatpush.xpose.msra.mxu0 %v449
    %469 = vmatmul.f32.gmra.mxu0 %v447
    %v470 = vpop.f32.mrf.mxu0
    %v471 = vadd.f32 0.0, %v470
    %472 = vdwg.mxu0
    %473 = vrot.lane.b32.xlu0 %v357, 120
    %v474 = vpop.permute.xlu0 %473
    %475 = vrot.lane.b32.xlu0 %v360, 120
    %v476 = vpop.permute.xlu0 %475
    %v477 = vsel %vm362, %v474, 0
    %v479 = vsel %vm362, %v476, 0
    %481 = vmatpush.xpose.msra.mxu0 0.0
    %482 = vmatpush.xpose.msra.mxu0 0.0
    %483 = vmatpush.xpose.msra.mxu0 0.0
    %484 = vmatpush.xpose.msra.mxu0 0.0
    %485 = vmatpush.xpose.msra.mxu0 0.0
    %486 = vmatpush.xpose.msra.mxu0 0.0
    %487 = vmatpush.xpose.msra.mxu0 0.0
    %488 = vmatpush.xpose.msra.mxu0 0.0
    %489 = vmatpush.xpose.msra.mxu0 0.0
    %490 = vmatpush.xpose.msra.mxu0 0.0
    %491 = vmatpush.xpose.msra.mxu0 0.0
    %492 = vmatpush.xpose.msra.mxu0 0.0
    %493 = vmatpush.xpose.msra.mxu0 0.0
    %494 = vmatpush.xpose.msra.mxu0 0.0
    %495 = vmatpush.xpose.msra.mxu0 %v479
    %496 = vmatpush.xpose.msra.mxu0 %v477
    %497 = vmatmul.f32.gmra.mxu0 %v447
    %v498 = vpop.f32.mrf.mxu0
    %v499 = vadd.f32 0.0, %v498
    %500 = vdwg.mxu0
    %v501 = vsel %vm418, %v471, -inf
    %502 = vmax.xlane.f32.xlu0 %v501
    %v503 = vpop.xlane.xlu0 %502
    %v504 = vsel %vm418, %v499, -inf
    %505 = vmax.xlane.f32.xlu0 %v504
    %v506 = vpop.xlane.xlu0 %505
    %v507 = vsub.f32 %v471, %v503
    %v508 = vsub.f32 %v499, %v506
    %v509 = vmul.f32 %v507, 1.442695
    %v510 = vpow.pop %v509
    %v511 = vmul.f32 %v508, 1.442695
    %v512 = vpow.pop %v511
    %v513 = vsel %vm418, %v510, 0.0
    %514 = vadd.xlane.f32.xlu0 %v513
    %v515 = vpop.xlane.xlu0 %514
    %v516 = vsel %vm418, %v512, 0.0
    %517 = vadd.xlane.f32.xlu0 %v516
    %v518 = vpop.xlane.xlu0 %517
    %v519 = vrcp.pop %v515
    %v520 = vrcp.pop %v518
    %v521 = vmul.f32 %v510, %v519
    %v522 = vmul.f32 %v512, %v520
    %525 = vrot.lane.b32.xlu0 %v322, 96
    %v526 = vpop.permute.xlu0 %525
    %527 = vrot.lane.b32.xlu0 %v325, 96
    %v528 = vpop.permute.xlu0 %527
    %v532 = vsel %vm418, %v521, 0
    %534 = vmatpush.msra.mxu0 0.0
    %535 = vmatpush.msra.mxu0 0.0
    %536 = vmatpush.msra.mxu0 0.0
    %537 = vmatpush.msra.mxu0 0.0
    %538 = vmatpush.msra.mxu0 0.0
    %539 = vmatpush.msra.mxu0 0.0
    %540 = vmatpush.msra.mxu0 0.0
    %541 = vmatpush.msra.mxu0 0.0
    %542 = vmatpush.msra.mxu0 0.0
    %543 = vmatpush.msra.mxu0 0.0
    %544 = vmatpush.msra.mxu0 0.0
    %545 = vmatpush.msra.mxu0 0.0
    %546 = vmatpush.msra.mxu0 0.0
    %547 = vmatpush.msra.mxu0 0.0
    %548 = vmatpush.msra.mxu0 %v528
    %549 = vmatpush.msra.mxu0 %v526
    %550 = vmatmul.f32.gmra.mxu0 %v532
    %v551 = vpop.f32.mrf.mxu0
    %v552 = vadd.f32 0.0, %v551
    %553 = vdwg.mxu0
    %556 = vrot.lane.b32.xlu0 %v328, 96
    %v557 = vpop.permute.xlu0 %556
    %558 = vrot.lane.b32.xlu0 %v331, 96
    %v559 = vpop.permute.xlu0 %558
    %v563 = vsel %vm418, %v522, 0
    %565 = vmatpush.msra.mxu0 0.0
    %566 = vmatpush.msra.mxu0 0.0
    %567 = vmatpush.msra.mxu0 0.0
    %568 = vmatpush.msra.mxu0 0.0
    %569 = vmatpush.msra.mxu0 0.0
    %570 = vmatpush.msra.mxu0 0.0
    %571 = vmatpush.msra.mxu0 0.0
    %572 = vmatpush.msra.mxu0 0.0
    %573 = vmatpush.msra.mxu0 0.0
    %574 = vmatpush.msra.mxu0 0.0
    %575 = vmatpush.msra.mxu0 0.0
    %576 = vmatpush.msra.mxu0 0.0
    %577 = vmatpush.msra.mxu0 0.0
    %578 = vmatpush.msra.mxu0 0.0
    %579 = vmatpush.msra.mxu0 %v559
    %580 = vmatpush.msra.mxu0 %v557
    %581 = vmatmul.f32.gmra.mxu0 %v563
    %v582 = vpop.f32.mrf.mxu0
    %v583 = vadd.f32 0.0, %v582
    %584 = vdwg.mxu0
    %v586 = vsel %vm418, %v439, 0
    %588 = vmatpush.msra.mxu0 0.0
    %589 = vmatpush.msra.mxu0 0.0
    %590 = vmatpush.msra.mxu0 0.0
    %591 = vmatpush.msra.mxu0 0.0
    %592 = vmatpush.msra.mxu0 0.0
    %593 = vmatpush.msra.mxu0 0.0
    %594 = vmatpush.msra.mxu0 0.0
    %595 = vmatpush.msra.mxu0 0.0
    %596 = vmatpush.msra.mxu0 0.0
    %597 = vmatpush.msra.mxu0 0.0
    %598 = vmatpush.msra.mxu0 0.0
    %599 = vmatpush.msra.mxu0 0.0
    %600 = vmatpush.msra.mxu0 0.0
    %601 = vmatpush.msra.mxu0 0.0
    %602 = vmatpush.msra.mxu0 %v325
    %603 = vmatpush.msra.mxu0 %v322
    %604 = vmatmul.f32.gmra.mxu0 %v586
    %v605 = vpop.f32.mrf.mxu0
    %v606 = vadd.f32 %v552, %v605
    %607 = vdwg.mxu0
    %v609 = vsel %vm418, %v440, 0
    %611 = vmatpush.msra.mxu0 0.0
    %612 = vmatpush.msra.mxu0 0.0
    %613 = vmatpush.msra.mxu0 0.0
    %614 = vmatpush.msra.mxu0 0.0
    %615 = vmatpush.msra.mxu0 0.0
    %616 = vmatpush.msra.mxu0 0.0
    %617 = vmatpush.msra.mxu0 0.0
    %618 = vmatpush.msra.mxu0 0.0
    %619 = vmatpush.msra.mxu0 0.0
    %620 = vmatpush.msra.mxu0 0.0
    %621 = vmatpush.msra.mxu0 0.0
    %622 = vmatpush.msra.mxu0 0.0
    %623 = vmatpush.msra.mxu0 0.0
    %624 = vmatpush.msra.mxu0 0.0
    %625 = vmatpush.msra.mxu0 %v331
    %626 = vmatpush.msra.mxu0 %v328
    %627 = vmatmul.f32.gmra.mxu0 %v609
    %v628 = vpop.f32.mrf.mxu0
    %v629 = vadd.f32 %v583, %v628
    %630 = vdwg.mxu0
    %631 = vrot.lane.b32.xlu0 %v276, 112
    %v632 = vpop.permute.xlu0 %631
    %633 = vrot.lane.b32.xlu0 %v351, 112
    %v634 = vpop.permute.xlu0 %633
    %635 = vrot.lane.b32.xlu0 %v354, 112
    %v636 = vpop.permute.xlu0 %635
    %v637 = vsel %vm362, %v632, 0
    %v639 = vsel %vm362, %v634, 0
    %v641 = vsel %vm362, %v636, 0
    %643 = vmatpush.xpose.msra.mxu0 0.0
    %644 = vmatpush.xpose.msra.mxu0 0.0
    %645 = vmatpush.xpose.msra.mxu0 0.0
    %646 = vmatpush.xpose.msra.mxu0 0.0
    %647 = vmatpush.xpose.msra.mxu0 0.0
    %648 = vmatpush.xpose.msra.mxu0 0.0
    %649 = vmatpush.xpose.msra.mxu0 0.0
    %650 = vmatpush.xpose.msra.mxu0 0.0
    %651 = vmatpush.xpose.msra.mxu0 0.0
    %652 = vmatpush.xpose.msra.mxu0 0.0
    %653 = vmatpush.xpose.msra.mxu0 0.0
    %654 = vmatpush.xpose.msra.mxu0 0.0
    %655 = vmatpush.xpose.msra.mxu0 0.0
    %656 = vmatpush.xpose.msra.mxu0 0.0
    %657 = vmatpush.xpose.msra.mxu0 %v641
    %658 = vmatpush.xpose.msra.mxu0 %v639
    %659 = vmatmul.f32.gmra.mxu0 %v637
    %v660 = vpop.f32.mrf.mxu0
    %v661 = vadd.f32 0.0, %v660
    %662 = vdwg.mxu0
    %663 = vrot.lane.b32.xlu0 %v357, 112
    %v664 = vpop.permute.xlu0 %663
    %665 = vrot.lane.b32.xlu0 %v360, 112
    %v666 = vpop.permute.xlu0 %665
    %v667 = vsel %vm362, %v664, 0
    %v669 = vsel %vm362, %v666, 0
    %671 = vmatpush.xpose.msra.mxu0 0.0
    %672 = vmatpush.xpose.msra.mxu0 0.0
    %673 = vmatpush.xpose.msra.mxu0 0.0
    %674 = vmatpush.xpose.msra.mxu0 0.0
    %675 = vmatpush.xpose.msra.mxu0 0.0
    %676 = vmatpush.xpose.msra.mxu0 0.0
    %677 = vmatpush.xpose.msra.mxu0 0.0
    %678 = vmatpush.xpose.msra.mxu0 0.0
    %679 = vmatpush.xpose.msra.mxu0 0.0
    %680 = vmatpush.xpose.msra.mxu0 0.0
    %681 = vmatpush.xpose.msra.mxu0 0.0
    %682 = vmatpush.xpose.msra.mxu0 0.0
    %683 = vmatpush.xpose.msra.mxu0 0.0
    %684 = vmatpush.xpose.msra.mxu0 0.0
    %685 = vmatpush.xpose.msra.mxu0 %v669
    %686 = vmatpush.xpose.msra.mxu0 %v667
    %687 = vmatmul.f32.gmra.mxu0 %v637
    %v688 = vpop.f32.mrf.mxu0
    %v689 = vadd.f32 0.0, %v688
    %690 = vdwg.mxu0
    %v691 = vsel %vm418, %v661, -inf
    %692 = vmax.xlane.f32.xlu0 %v691
    %v693 = vpop.xlane.xlu0 %692
    %v694 = vsel %vm418, %v689, -inf
    %695 = vmax.xlane.f32.xlu0 %v694
    %v696 = vpop.xlane.xlu0 %695
    %v697 = vsub.f32 %v661, %v693
    %v698 = vsub.f32 %v689, %v696
    %v699 = vmul.f32 %v697, 1.442695
    %v700 = vpow.pop %v699
    %v701 = vmul.f32 %v698, 1.442695
    %v702 = vpow.pop %v701
    %v703 = vsel %vm418, %v700, 0.0
    %704 = vadd.xlane.f32.xlu0 %v703
    %v705 = vpop.xlane.xlu0 %704
    %v706 = vsel %vm418, %v702, 0.0
    %707 = vadd.xlane.f32.xlu0 %v706
    %v708 = vpop.xlane.xlu0 %707
    %v709 = vrcp.pop %v705
    %v710 = vrcp.pop %v708
    %v711 = vmul.f32 %v700, %v709
    %v712 = vmul.f32 %v702, %v710
    %713 = vrot.lane.b32.xlu0 %v322, 64
    %v714 = vpop.permute.xlu0 %713
    %715 = vrot.lane.b32.xlu0 %v325, 64
    %v716 = vpop.permute.xlu0 %715
    %v720 = vsel %vm418, %v711, 0
    %722 = vmatpush.msra.mxu0 0.0
    %723 = vmatpush.msra.mxu0 0.0
    %724 = vmatpush.msra.mxu0 0.0
    %725 = vmatpush.msra.mxu0 0.0
    %726 = vmatpush.msra.mxu0 0.0
    %727 = vmatpush.msra.mxu0 0.0
    %728 = vmatpush.msra.mxu0 0.0
    %729 = vmatpush.msra.mxu0 0.0
    %730 = vmatpush.msra.mxu0 0.0
    %731 = vmatpush.msra.mxu0 0.0
    %732 = vmatpush.msra.mxu0 0.0
    %733 = vmatpush.msra.mxu0 0.0
    %734 = vmatpush.msra.mxu0 0.0
    %735 = vmatpush.msra.mxu0 0.0
    %736 = vmatpush.msra.mxu0 %v716
    %737 = vmatpush.msra.mxu0 %v714
    %738 = vmatmul.f32.gmra.mxu0 %v720
    %v739 = vpop.f32.mrf.mxu0
    %v740 = vadd.f32 0.0, %v739
    %741 = vdwg.mxu0
    %742 = vrot.lane.b32.xlu0 %v328, 64
    %v743 = vpop.permute.xlu0 %742
    %744 = vrot.lane.b32.xlu0 %v331, 64
    %v745 = vpop.permute.xlu0 %744
    %v749 = vsel %vm418, %v712, 0
    %751 = vmatpush.msra.mxu0 0.0
    %752 = vmatpush.msra.mxu0 0.0
    %753 = vmatpush.msra.mxu0 0.0
    %754 = vmatpush.msra.mxu0 0.0
    %755 = vmatpush.msra.mxu0 0.0
    %756 = vmatpush.msra.mxu0 0.0
    %757 = vmatpush.msra.mxu0 0.0
    %758 = vmatpush.msra.mxu0 0.0
    %759 = vmatpush.msra.mxu0 0.0
    %760 = vmatpush.msra.mxu0 0.0
    %761 = vmatpush.msra.mxu0 0.0
    %762 = vmatpush.msra.mxu0 0.0
    %763 = vmatpush.msra.mxu0 0.0
    %764 = vmatpush.msra.mxu0 0.0
    %765 = vmatpush.msra.mxu0 %v745
    %766 = vmatpush.msra.mxu0 %v743
    %767 = vmatmul.f32.gmra.mxu0 %v749
    %v768 = vpop.f32.mrf.mxu0
    %v769 = vadd.f32 0.0, %v768
    %770 = vdwg.mxu0
    %v771 = vadd.f32 %v606, %v740
    %v772 = vadd.f32 %v629, %v769
    %773 = vrot.lane.b32.xlu0 %v276, 104
    %v774 = vpop.permute.xlu0 %773
    %775 = vrot.lane.b32.xlu0 %v351, 104
    %v776 = vpop.permute.xlu0 %775
    %777 = vrot.lane.b32.xlu0 %v354, 104
    %v778 = vpop.permute.xlu0 %777
    %v779 = vsel %vm362, %v774, 0
    %v781 = vsel %vm362, %v776, 0
    %v783 = vsel %vm362, %v778, 0
    %785 = vmatpush.xpose.msra.mxu0 0.0
    %786 = vmatpush.xpose.msra.mxu0 0.0
    %787 = vmatpush.xpose.msra.mxu0 0.0
    %788 = vmatpush.xpose.msra.mxu0 0.0
    %789 = vmatpush.xpose.msra.mxu0 0.0
    %790 = vmatpush.xpose.msra.mxu0 0.0
    %791 = vmatpush.xpose.msra.mxu0 0.0
    %792 = vmatpush.xpose.msra.mxu0 0.0
    %793 = vmatpush.xpose.msra.mxu0 0.0
    %794 = vmatpush.xpose.msra.mxu0 0.0
    %795 = vmatpush.xpose.msra.mxu0 0.0
    %796 = vmatpush.xpose.msra.mxu0 0.0
    %797 = vmatpush.xpose.msra.mxu0 0.0
    %798 = vmatpush.xpose.msra.mxu0 0.0
    %799 = vmatpush.xpose.msra.mxu0 %v783
    %800 = vmatpush.xpose.msra.mxu0 %v781
    %801 = vmatmul.f32.gmra.mxu0 %v779
    %v802 = vpop.f32.mrf.mxu0
    %v803 = vadd.f32 0.0, %v802
    %804 = vdwg.mxu0
    %805 = vrot.lane.b32.xlu0 %v357, 104
    %v806 = vpop.permute.xlu0 %805
    %807 = vrot.lane.b32.xlu0 %v360, 104
    %v808 = vpop.permute.xlu0 %807
    %v809 = vsel %vm362, %v806, 0
    %v811 = vsel %vm362, %v808, 0
    %813 = vmatpush.xpose.msra.mxu0 0.0
    %814 = vmatpush.xpose.msra.mxu0 0.0
    %815 = vmatpush.xpose.msra.mxu0 0.0
    %816 = vmatpush.xpose.msra.mxu0 0.0
    %817 = vmatpush.xpose.msra.mxu0 0.0
    %818 = vmatpush.xpose.msra.mxu0 0.0
    %819 = vmatpush.xpose.msra.mxu0 0.0
    %820 = vmatpush.xpose.msra.mxu0 0.0
    %821 = vmatpush.xpose.msra.mxu0 0.0
    %822 = vmatpush.xpose.msra.mxu0 0.0
    %823 = vmatpush.xpose.msra.mxu0 0.0
    %824 = vmatpush.xpose.msra.mxu0 0.0
    %825 = vmatpush.xpose.msra.mxu0 0.0
    %826 = vmatpush.xpose.msra.mxu0 0.0
    %827 = vmatpush.xpose.msra.mxu0 %v811
    %828 = vmatpush.xpose.msra.mxu0 %v809
    %829 = vmatmul.f32.gmra.mxu0 %v779
    %v830 = vpop.f32.mrf.mxu0
    %v831 = vadd.f32 0.0, %v830
    %832 = vdwg.mxu0
    %v833 = vsel %vm418, %v803, -inf
    %834 = vmax.xlane.f32.xlu0 %v833
    %v835 = vpop.xlane.xlu0 %834
    %v836 = vsel %vm418, %v831, -inf
    %837 = vmax.xlane.f32.xlu0 %v836
    %v838 = vpop.xlane.xlu0 %837
    %v839 = vsub.f32 %v803, %v835
    %v840 = vsub.f32 %v831, %v838
    %v841 = vmul.f32 %v839, 1.442695
    %v842 = vpow.pop %v841
    %v843 = vmul.f32 %v840, 1.442695
    %v844 = vpow.pop %v843
    %v845 = vsel %vm418, %v842, 0.0
    %846 = vadd.xlane.f32.xlu0 %v845
    %v847 = vpop.xlane.xlu0 %846
    %v848 = vsel %vm418, %v844, 0.0
    %849 = vadd.xlane.f32.xlu0 %v848
    %v850 = vpop.xlane.xlu0 %849
    %v851 = vrcp.pop %v847
    %v852 = vrcp.pop %v850
    %v853 = vmul.f32 %v842, %v851
    %v854 = vmul.f32 %v844, %v852
    %855 = vrot.lane.b32.xlu0 %v322, 32
    %v856 = vpop.permute.xlu0 %855
    %857 = vrot.lane.b32.xlu0 %v325, 32
    %v858 = vpop.permute.xlu0 %857
    %v862 = vsel %vm418, %v853, 0
    %864 = vmatpush.msra.mxu0 0.0
    %865 = vmatpush.msra.mxu0 0.0
    %866 = vmatpush.msra.mxu0 0.0
    %867 = vmatpush.msra.mxu0 0.0
    %868 = vmatpush.msra.mxu0 0.0
    %869 = vmatpush.msra.mxu0 0.0
    %870 = vmatpush.msra.mxu0 0.0
    %871 = vmatpush.msra.mxu0 0.0
    %872 = vmatpush.msra.mxu0 0.0
    %873 = vmatpush.msra.mxu0 0.0
    %874 = vmatpush.msra.mxu0 0.0
    %875 = vmatpush.msra.mxu0 0.0
    %876 = vmatpush.msra.mxu0 0.0
    %877 = vmatpush.msra.mxu0 0.0
    %878 = vmatpush.msra.mxu0 %v858
    %879 = vmatpush.msra.mxu0 %v856
    %880 = vmatmul.f32.gmra.mxu0 %v862
    %v881 = vpop.f32.mrf.mxu0
    %v882 = vadd.f32 0.0, %v881
    %883 = vdwg.mxu0
    %884 = vrot.lane.b32.xlu0 %v328, 32
    %v885 = vpop.permute.xlu0 %884
    %886 = vrot.lane.b32.xlu0 %v331, 32
    %v887 = vpop.permute.xlu0 %886
    %v891 = vsel %vm418, %v854, 0
    %893 = vmatpush.msra.mxu0 0.0
    %894 = vmatpush.msra.mxu0 0.0
    %895 = vmatpush.msra.mxu0 0.0
    %896 = vmatpush.msra.mxu0 0.0
    %897 = vmatpush.msra.mxu0 0.0
    %898 = vmatpush.msra.mxu0 0.0
    %899 = vmatpush.msra.mxu0 0.0
    %900 = vmatpush.msra.mxu0 0.0
    %901 = vmatpush.msra.mxu0 0.0
    %902 = vmatpush.msra.mxu0 0.0
    %903 = vmatpush.msra.mxu0 0.0
    %904 = vmatpush.msra.mxu0 0.0
    %905 = vmatpush.msra.mxu0 0.0
    %906 = vmatpush.msra.mxu0 0.0
    %907 = vmatpush.msra.mxu0 %v887
    %908 = vmatpush.msra.mxu0 %v885
    %909 = vmatmul.f32.gmra.mxu0 %v891
    %v910 = vpop.f32.mrf.mxu0
    %v911 = vadd.f32 0.0, %v910
    %912 = vdwg.mxu0
    %v913 = vadd.f32 %v771, %v882
    %v914 = vadd.f32 %v772, %v911
    %v915 = vperm.slane %v112, 4
    %v916 = vadd.f32 %v913, %v915
    %v917 = vadd.f32 %v914, %v915
    %918 = vst.msk [vmem:[#allocation13] sm:$0xff] %vm117, %v916
    %919 = vst.msk [vmem:[#allocation13 + $0x8] sm:$0xff] %vm117, %v917
    // Predicated region
    $region50: #{attentional_pooler.1} parent=1 // pred_check
      _
    $region51: #{attentional_pooler.1} parent=1 // pred_check_branch
      %921 = sbr.rel (0) target = $region53
    $region52: #{attentional_pooler.1} parent=1 // pred_region
      %923 = vsyncadd [#allocation4], 0
      %s924 = sshll.u32 [#allocation13], 4
      %s925 = int_to_ptr.vmem [resolvable:$true] %s924
      %s926 = sshll.u32 %s6, 4
      %s927 = int_to_ptr.hbm [resolvable:$true] %s926
      %932 = dma.vmem_to_hbm [thread:$0]  %s925, 256, %s927, [#allocation4], 128, 128, 8
    $region53: #{attentional_pooler.1} parent=1 // pred_fallthru
      _
    // Predicated region
    $region54: #{attentional_pooler.1} parent=1 // pred_check
      _
    $region55: #{attentional_pooler.1} parent=1 // pred_check_branch
      %934 = sbr.rel (0) target = $region57
    $region56: #{attentional_pooler.1} parent=1 // pred_region
      %936 = dma.done [#allocation4], 256
    $region57: #{attentional_pooler.1} parent=1 // pred_fallthru
      _
    %937 = vsyncpa [#allocation3], 1
    %938 = vsyncpa [#allocation6], 1
    %939 = vsyncpa [#allocation9], 1
    %940 = vsyncpa [#allocation12], 1
    %941 = vsyncpa [#allocation4], 1

</llo_original>
